<compile_context>
chip_gen: v6e
topology: v6e:2x2x1
jax: 0.10.0
libtpu: 0.0.40
codegen_flags: <defaults>
</compile_context>

<pallas_src>
import functools

import jax
import jax.numpy as jnp
from jax.experimental import pallas as pl
from jax.experimental.pallas import tpu as pltpu

LANE = 128


def _round_up(d: int, m: int = LANE) -> int:
    return ((d + m - 1) // m) * m


# ----------------------------------------------------------------------------
# Fused Pallas kernel: (concat) -> [Linear + ReLU]*H -> Linear
# ----------------------------------------------------------------------------
def _fused_mlp_kernel(*refs, num_layers: int, has_dense: bool):
    """Ref order:
         rep, [dense],
         w0_rep_t, [w0_dense_t], b0,
         (w_i_t, b_i) for i = 1 .. num_layers-1,
         out
       Weights are pre-transposed to [in, out_padded]; biases are [1, out_padded].
       Padded columns/rows/bias entries are zero, so padded lanes stay exactly 0
       through every layer.
    """
    it = iter(refs)
    rep_ref = next(it)
    dense_ref = next(it) if has_dense else None
    w0r_ref = next(it)
    w0d_ref = next(it) if has_dense else None
    b0_ref = next(it)
    tail = [(next(it), next(it)) for _ in range(num_layers - 1)]
    o_ref = next(it)

    # Layer 0: concat fused as two accumulating MXU dots (f32 accumulate).
    x = jnp.dot(rep_ref[...], w0r_ref[...], preferred_element_type=jnp.float32)
    if has_dense:
        x = x + jnp.dot(dense_ref[...], w0d_ref[...],
                        preferred_element_type=jnp.float32)
    x = x + b0_ref[...]
    if num_layers > 1:
        x = jnp.maximum(x, 0.0)  # ReLU (module default activation)

    # Hidden layers 1..n-2 (ReLU) and final layer n-1 (no activation).
    # TODO(synk): only Activation.RELU (the module default) is implemented.
    for li, (w_ref, b_ref) in enumerate(tail):
        x = jnp.dot(x, w_ref[...], preferred_element_type=jnp.float32) + b_ref[...]
        if li != num_layers - 2:
            x = jnp.maximum(x, 0.0)

    o_ref[...] = x.astype(o_ref.dtype)


# ----------------------------------------------------------------------------
# Parameter construction (mirrors nn.Linear shapes) and one-time preparation
# ----------------------------------------------------------------------------
def init_mlp_decoder_params(key, in_dim, out_dim, hidden_dims, bias=True):
    """torch-style params: list of (W [out,in], b [out])."""
    params = []
    d_in = in_dim
    for d in list(hidden_dims or []) + [out_dim]:
        key, wk, bk = jax.random.split(key, 3)
        bound = 1.0 / jnp.sqrt(jnp.float32(d_in))
        w = jax.random.uniform(wk, (d, d_in), jnp.float32, -bound, bound)
        b = (jax.random.uniform(bk, (d,), jnp.float32, -bound, bound)
             if bias else jnp.zeros((d,), jnp.float32))
        params.append((w, b))
        d_in = d
    return params


def prepare_mlp_decoder(params, rep_dim, dense_dim):
    """One-time prep: transpose weights, split layer 0 for the fused concat,
    and zero-pad every layer's output dim (and matching input rows) to a
    multiple of 128 so activations are lane-dense inside the kernel."""
    has_dense = dense_dim is not None and dense_dim > 0
    num_layers = len(params)
    flat = []
    for li, (w, b) in enumerate(params):
        d_out, d_in = w.shape
        d_out_p = _round_up(d_out)
        w_t = jnp.transpose(w)                                   # [d_in, d_out]
        w_t = jnp.pad(w_t, ((0, 0), (0, d_out_p - d_out)))       # pad out cols
        b_p = jnp.pad(b, (0, d_out_p - d_out)).reshape(1, d_out_p)
        if li == 0:
            if has_dense:
                flat.append(w_t[:rep_dim, :])                    # [rep_dim, H1p]
                flat.append(w_t[rep_dim:, :])                    # [dense_dim, H1p]
            else:
                flat.append(w_t)
        else:
            d_in_p = _round_up(d_in)                             # match padded acts
            w_t = jnp.pad(w_t, ((0, d_in_p - d_in), (0, 0)))
            flat.append(w_t)
        flat.append(b_p)
    meta = {
        "num_layers": num_layers,
        "has_dense": has_dense,
        "out_dim": params[-1][0].shape[0],
        "out_dim_padded": _round_up(params[-1][0].shape[0]),
    }
    return flat, meta


# ----------------------------------------------------------------------------
# Forward (single pallas_call)
# ----------------------------------------------------------------------------
def mlp_decoder_forward(flat_weights, meta, representation, dense=None):
    has_dense = meta["has_dense"]
    if has_dense:
        assert dense is not None
        inputs = [representation, dense]
    else:
        inputs = [representation]
    inputs = inputs + list(flat_weights)

    kernel = functools.partial(
        _fused_mlp_kernel,
        num_layers=meta["num_layers"],
        has_dense=has_dense,
    )
    B = representation.shape[0]
    out_padded = pl.pallas_call(
        kernel,
        out_shape=jax.ShapeDtypeStruct((B, meta["out_dim_padded"]),
                                       representation.dtype),
        # No grid: single invocation, full arrays resident in VMEM.
        in_specs=[pl.BlockSpec(memory_space=pltpu.MemorySpace.VMEM)
                  for _ in inputs],
        out_specs=pl.BlockSpec(memory_space=pltpu.MemorySpace.VMEM),
    )(*inputs)
    return out_padded[:, :meta["out_dim"]]


# ----------------------------------------------------------------------------
# Reference (plain JAX) for sanity check
# ----------------------------------------------------------------------------
def mlp_decoder_reference(params, representation, dense=None):
    x = representation
    if dense is not None:
        x = jnp.concatenate([representation, dense], axis=1)
    n = len(params)
    for li, (w, b) in enumerate(params):
        x = x @ w.T + b
        if li != n - 1:
            x = jnp.maximum(x, 0.0)
    return x


if __name__ == "__main__":
    key = jax.random.PRNGKey(0)

    # Small shapes consistent with the module's forward:
    #   representation: [batch, rep_dim], dense: [batch, dense_dim]
    batch = 2
    rep_dim = 24
    dense_dim = 8
    in_dim = rep_dim + dense_dim          # 32
    hidden_dims = [32, 16]
    out_dim = 4

    k_rep, k_dense, k_params = jax.random.split(key, 3)
    representation = jax.random.normal(k_rep, (batch, rep_dim), jnp.float32)
    dense = jax.random.normal(k_dense, (batch, dense_dim), jnp.float32)

    params = init_mlp_decoder_params(k_params, in_dim, out_dim, hidden_dims,
                                     bias=True)
    flat_weights, meta = prepare_mlp_decoder(params, rep_dim, dense_dim)

    out = mlp_decoder_forward(flat_weights, meta, representation, dense)
    out = jax.block_until_ready(out)

    ref = mlp_decoder_reference(params, representation, dense)
    assert out.shape == (batch, out_dim), out.shape
    assert jnp.allclose(out, ref, atol=1e-5, rtol=1e-5), (out, ref)

    print("KERNEL_OK")
</pallas_src>

<mosaic_0001>
module attributes {stable_mosaic.version = 11 : i64} {
  func.func @_fused_mlp_kernel(%arg0: memref<2x24xf32, #tpu.memory_space<vmem>>, %arg1: memref<2x8xf32, #tpu.memory_space<vmem>>, %arg2: memref<24x128xf32, #tpu.memory_space<vmem>>, %arg3: memref<8x128xf32, #tpu.memory_space<vmem>>, %arg4: memref<1x128xf32, #tpu.memory_space<vmem>>, %arg5: memref<128x128xf32, #tpu.memory_space<vmem>>, %arg6: memref<1x128xf32, #tpu.memory_space<vmem>>, %arg7: memref<128x128xf32, #tpu.memory_space<vmem>>, %arg8: memref<1x128xf32, #tpu.memory_space<vmem>>, %arg9: memref<2x128xf32, #tpu.memory_space<vmem>>) attributes {dimension_semantics = [], scalar_prefetch = 0 : i64, scratch_operands = 0 : i64, tpu.core_type = #tpu.core_type<tc>} {
    %c0 = arith.constant 0 : index
    %c0_0 = arith.constant 0 : index
    %0 = vector.load %arg0[%c0, %c0_0] : memref<2x24xf32, #tpu.memory_space<vmem>>, vector<2x24xf32>
    %c0_1 = arith.constant 0 : index
    %c0_2 = arith.constant 0 : index
    %1 = vector.load %arg2[%c0_1, %c0_2] : memref<24x128xf32, #tpu.memory_space<vmem>>, vector<24x128xf32>
    %cst = arith.constant dense<0.000000e+00> : vector<2x128xf32>
    %2 = tpu.matmul %0, %1, %cst {dimension_numbers = #tpu.dot_dimension_numbers<[1], [0], [0], [1], [0, 0, 1, 1], [], []>} : vector<2x24xf32>, vector<24x128xf32>, vector<2x128xf32> -> vector<2x128xf32>
    %c0_3 = arith.constant 0 : index
    %c0_4 = arith.constant 0 : index
    %3 = vector.load %arg1[%c0_3, %c0_4] : memref<2x8xf32, #tpu.memory_space<vmem>>, vector<2x8xf32>
    %c0_5 = arith.constant 0 : index
    %c0_6 = arith.constant 0 : index
    %4 = vector.load %arg3[%c0_5, %c0_6] : memref<8x128xf32, #tpu.memory_space<vmem>>, vector<8x128xf32>
    %cst_7 = arith.constant dense<0.000000e+00> : vector<2x128xf32>
    %5 = tpu.matmul %3, %4, %cst_7 {dimension_numbers = #tpu.dot_dimension_numbers<[1], [0], [0], [1], [0, 0, 1, 1], [], []>} : vector<2x8xf32>, vector<8x128xf32>, vector<2x128xf32> -> vector<2x128xf32>
    %6 = arith.addf %2, %5 : vector<2x128xf32>
    %c0_8 = arith.constant 0 : index
    %c0_9 = arith.constant 0 : index
    %7 = vector.load %arg4[%c0_8, %c0_9] : memref<1x128xf32, #tpu.memory_space<vmem>>, vector<1x128xf32>
    %8 = vector.broadcast %7 : vector<1x128xf32> to vector<2x128xf32>
    %9 = arith.addf %6, %8 : vector<2x128xf32>
    %cst_10 = arith.constant 0.000000e+00 : f32
    %10 = vector.broadcast %cst_10 : f32 to vector<2x128xf32>
    %11 = arith.maximumf %9, %10 : vector<2x128xf32>
    %c0_11 = arith.constant 0 : index
    %c0_12 = arith.constant 0 : index
    %12 = vector.load %arg5[%c0_11, %c0_12] : memref<128x128xf32, #tpu.memory_space<vmem>>, vector<128x128xf32>
    %cst_13 = arith.constant dense<0.000000e+00> : vector<2x128xf32>
    %13 = tpu.matmul %11, %12, %cst_13 {dimension_numbers = #tpu.dot_dimension_numbers<[1], [0], [0], [1], [0, 0, 1, 1], [], []>} : vector<2x128xf32>, vector<128x128xf32>, vector<2x128xf32> -> vector<2x128xf32>
    %c0_14 = arith.constant 0 : index
    %c0_15 = arith.constant 0 : index
    %14 = vector.load %arg6[%c0_14, %c0_15] : memref<1x128xf32, #tpu.memory_space<vmem>>, vector<1x128xf32>
    %15 = vector.broadcast %14 : vector<1x128xf32> to vector<2x128xf32>
    %16 = arith.addf %13, %15 : vector<2x128xf32>
    %cst_16 = arith.constant 0.000000e+00 : f32
    %17 = vector.broadcast %cst_16 : f32 to vector<2x128xf32>
    %18 = arith.maximumf %16, %17 : vector<2x128xf32>
    %c0_17 = arith.constant 0 : index
    %c0_18 = arith.constant 0 : index
    %19 = vector.load %arg7[%c0_17, %c0_18] : memref<128x128xf32, #tpu.memory_space<vmem>>, vector<128x128xf32>
    %cst_19 = arith.constant dense<0.000000e+00> : vector<2x128xf32>
    %20 = tpu.matmul %18, %19, %cst_19 {dimension_numbers = #tpu.dot_dimension_numbers<[1], [0], [0], [1], [0, 0, 1, 1], [], []>} : vector<2x128xf32>, vector<128x128xf32>, vector<2x128xf32> -> vector<2x128xf32>
    %c0_20 = arith.constant 0 : index
    %c0_21 = arith.constant 0 : index
    %21 = vector.load %arg8[%c0_20, %c0_21] : memref<1x128xf32, #tpu.memory_space<vmem>>, vector<1x128xf32>
    %22 = vector.broadcast %21 : vector<1x128xf32> to vector<2x128xf32>
    %23 = arith.addf %20, %22 : vector<2x128xf32>
    %c0_22 = arith.constant 0 : index
    %c0_23 = arith.constant 0 : index
    %24 = vector.load %arg9[%c0_22, %c0_23] : memref<2x128xf32, #tpu.memory_space<vmem>>, vector<2x128xf32>
    tpu.vector_store %arg9[%c0_22, %c0_23], %23 {strides = array<i32>} : memref<2x128xf32, #tpu.memory_space<vmem>>, vector<2x128xf32>,
    return
  }
}

</mosaic_0001>

<llo_original>
// kernel: tpu_custom_call.1
$region0: #{tpu_custom_call.1}
  #allocation0 [shape = 'u32[]', space=smem, size = 0x4, offset = 0x4, fixed_abs, tag = 'smem constant byte address 0x4 - core index']
  #allocation1 [shape = 'u32[144,128]{1,0:T(1,128)}', space=vmem, size = 0x12000, scoped, tag = 'internal scratch']
  %s0 = inlined_call_operand.hbm [shape: f32[2,24], index: 0, kind: input, shape index: {}]
  %s1 = inlined_call_operand.hbm [shape: f32[2,8], index: 1, kind: input, shape index: {}]
  %s2 = inlined_call_operand.hbm [shape: f32[24,128], index: 2, kind: input, shape index: {}]
  %s3 = inlined_call_operand.hbm [shape: f32[8,128], index: 3, kind: input, shape index: {}]
  %s4 = inlined_call_operand.vmem [shape: f32[1,128], index: 4, kind: input, shape index: {}]
  %s5 = inlined_call_operand.hbm [shape: f32[128,128], index: 5, kind: input, shape index: {}]
  %s6 = inlined_call_operand.vmem [shape: f32[1,128], index: 6, kind: input, shape index: {}]
  %s7 = inlined_call_operand.hbm [shape: f32[128,128], index: 7, kind: input, shape index: {}]
  %s8 = inlined_call_operand.vmem [shape: f32[1,128], index: 8, kind: input, shape index: {}]
  %s9 = inlined_call_operand.hbm [shape: f32[2,128], index: 9, kind: output, shape index: {}]
  %s10 = sld [smem:[#allocation0]]
  $region70: #{tpu_custom_call.1} parent=0
    _
  %s12 = ssub.s32 1, %s10
  %s13 = scalar_select 0, %s12, %s10
  $region1: #{tpu_custom_call.1} parent=0
    #allocation2 [shape = 'u8[1024]{0}', space=vmem, size = 0x400, scoped, tag = 'input window, operand 0, single buffered']
    #allocation3 [shape = 's32[1]{0}', space=sflag, size = 0x4, scoped, tag = 'scoped memory for tpu_custom_call.1']
    #allocation4 [shape = 's32[1]{0}', space=sflag, size = 0x4, scoped, tag = 'scoped memory for tpu_custom_call.1']
    #allocation5 [shape = 'u8[1024]{0}', space=vmem, size = 0x400, scoped, tag = 'input window, operand 1, single buffered']
    #allocation6 [shape = 's32[1]{0}', space=sflag, size = 0x4, scoped, tag = 'scoped memory for tpu_custom_call.1']
    #allocation7 [shape = 'u8[12288]{0}', space=vmem, size = 0x3000, scoped, tag = 'input window, operand 2, single buffered']
    #allocation8 [shape = 'u8[4096]{0}', space=vmem, size = 0x1000, scoped, tag = 'input window, operand 3, single buffered']
    #allocation9 [shape = 's32[1]{0}', space=sflag, size = 0x4, scoped, tag = 'scoped memory for tpu_custom_call.1']
    #allocation10 [shape = 'u8[65536]{0}', space=vmem, size = 0x10000, scoped, tag = 'input window, operand 5, single buffered']
    #allocation11 [shape = 'u8[65536]{0}', space=vmem, size = 0x10000, scoped, tag = 'input window, operand 7, single buffered']
    #allocation12 [shape = 's32[1]{0}', space=sflag, size = 0x4, scoped, tag = 'scoped memory for tpu_custom_call.1']
    #allocation13 [shape = 'u8[1024]{0}', space=vmem, size = 0x400, scoped, tag = 'output window, operand 0, single buffered']
    %14 = vsyncpa [#allocation3], 0
    %15 = vsyncpa [#allocation6], 0
    %16 = vsyncpa [#allocation9], 0
    %17 = vsyncpa [#allocation12], 0
    %18 = vsyncpa [#allocation4], 0
    // Predicated region
    $region2: #{tpu_custom_call.1} parent=1 // pred_check
      _
    $region3: #{tpu_custom_call.1} parent=1 // pred_check_branch
      %20 = sbr.rel (0) target = $region5
    $region4: #{tpu_custom_call.1} parent=1 // pred_region
      %s22 = ssub.s32 32, 32
      %23 = vsyncadd [#allocation3], %s22
      %s25 = sshll.u32 [#allocation2], 4
      %s26 = int_to_ptr.vmem [resolvable:$true] %s25
      %28 = dma.hbm_to_vmem [thread:$0]  %s0, 32, %s26, [#allocation3]
    $region5: #{tpu_custom_call.1} parent=1 // pred_fallthru
      _
    // Predicated region
    $region6: #{tpu_custom_call.1} parent=1 // pred_check
      _
    $region7: #{tpu_custom_call.1} parent=1 // pred_check_branch
      %30 = sbr.rel (0) target = $region9
    $region8: #{tpu_custom_call.1} parent=1 // pred_region
      %s32 = ssub.s32 32, 32
      %33 = vsyncadd [#allocation6], %s32
      %s35 = sshll.u32 [#allocation5], 4
      %s36 = int_to_ptr.vmem [resolvable:$true] %s35
      %38 = dma.hbm_to_vmem [thread:$0]  %s1, 32, %s36, [#allocation6]
    $region9: #{tpu_custom_call.1} parent=1 // pred_fallthru
      _
    // Predicated region
    $region10: #{tpu_custom_call.1} parent=1 // pred_check
      _
    $region11: #{tpu_custom_call.1} parent=1 // pred_check_branch
      %40 = sbr.rel (0) target = $region13
    $region12: #{tpu_custom_call.1} parent=1 // pred_region
      %s42 = ssub.s32 384, 384
      %43 = vsyncadd [#allocation6], %s42
      %s44 = sshll.u32 [#allocation7], 4
      %s45 = int_to_ptr.vmem [resolvable:$true] %s44
      %50 = dma.hbm_to_vmem [thread:$0]  %s2, 384, %s45, [#allocation6], 128, 128, 8
    $region13: #{tpu_custom_call.1} parent=1 // pred_fallthru
      _
    // Predicated region
    $region14: #{tpu_custom_call.1} parent=1 // pred_check
      _
    $region15: #{tpu_custom_call.1} parent=1 // pred_check_branch
      %52 = sbr.rel (0) target = $region17
    $region16: #{tpu_custom_call.1} parent=1 // pred_region
      %s54 = ssub.s32 128, 128
      %55 = vsyncadd [#allocation9], %s54
      %s57 = sshll.u32 [#allocation8], 4
      %s58 = int_to_ptr.vmem [resolvable:$true] %s57
      %60 = dma.hbm_to_vmem [thread:$0]  %s3, 128, %s58, [#allocation9]
    $region17: #{tpu_custom_call.1} parent=1 // pred_fallthru
      _
    // Predicated region
    $region18: #{tpu_custom_call.1} parent=1 // pred_check
      _
    $region19: #{tpu_custom_call.1} parent=1 // pred_check_branch
      %62 = sbr.rel (0) target = $region21
    $region20: #{tpu_custom_call.1} parent=1 // pred_region
      _
    $region21: #{tpu_custom_call.1} parent=1 // pred_fallthru
      _
    // Predicated region
    $region22: #{tpu_custom_call.1} parent=1 // pred_check
      _
    $region23: #{tpu_custom_call.1} parent=1 // pred_check_branch
      %64 = sbr.rel (0) target = $region25
    $region24: #{tpu_custom_call.1} parent=1 // pred_region
      %s66 = ssub.s32 2048, 2048
      %67 = vsyncadd [#allocation9], %s66
      %s68 = sshll.u32 [#allocation10], 4
      %s69 = int_to_ptr.vmem [resolvable:$true] %s68
      %74 = dma.hbm_to_vmem [thread:$0]  %s5, 2048, %s69, [#allocation9], 128, 128, 8
    $region25: #{tpu_custom_call.1} parent=1 // pred_fallthru
      _
    // Predicated region
    $region26: #{tpu_custom_call.1} parent=1 // pred_check
      _
    $region27: #{tpu_custom_call.1} parent=1 // pred_check_branch
      %76 = sbr.rel (0) target = $region29
    $region28: #{tpu_custom_call.1} parent=1 // pred_region
      _
    $region29: #{tpu_custom_call.1} parent=1 // pred_fallthru
      _
    // Predicated region
    $region30: #{tpu_custom_call.1} parent=1 // pred_check
      _
    $region31: #{tpu_custom_call.1} parent=1 // pred_check_branch
      %78 = sbr.rel (0) target = $region33
    $region32: #{tpu_custom_call.1} parent=1 // pred_region
      %s80 = ssub.s32 2048, 2048
      %81 = vsyncadd [#allocation12], %s80
      %s82 = sshll.u32 [#allocation11], 4
      %s83 = int_to_ptr.vmem [resolvable:$true] %s82
      %88 = dma.hbm_to_vmem [thread:$0]  %s7, 2048, %s83, [#allocation12], 128, 128, 8
    $region33: #{tpu_custom_call.1} parent=1 // pred_fallthru
      _
    // Predicated region
    $region34: #{tpu_custom_call.1} parent=1 // pred_check
      _
    $region35: #{tpu_custom_call.1} parent=1 // pred_check_branch
      %90 = sbr.rel (0) target = $region37
    $region36: #{tpu_custom_call.1} parent=1 // pred_region
      _
    $region37: #{tpu_custom_call.1} parent=1 // pred_fallthru
      _
    // Predicated region
    $region38: #{tpu_custom_call.1} parent=1 // pred_check
      _
    $region39: #{tpu_custom_call.1} parent=1 // pred_check_branch
      %92 = sbr.rel (0) target = $region41
    $region40: #{tpu_custom_call.1} parent=1 // pred_region
      %93 = dma.done [#allocation3], 32
    $region41: #{tpu_custom_call.1} parent=1 // pred_fallthru
      _
    // Predicated region
    $region42: #{tpu_custom_call.1} parent=1 // pred_check
      _
    $region43: #{tpu_custom_call.1} parent=1 // pred_check_branch
      %95 = sbr.rel (0) target = $region45
    $region44: #{tpu_custom_call.1} parent=1 // pred_region
      %96 = dma.done [#allocation6], 32
    $region45: #{tpu_custom_call.1} parent=1 // pred_fallthru
      _
    // Predicated region
    $region46: #{tpu_custom_call.1} parent=1 // pred_check
      _
    $region47: #{tpu_custom_call.1} parent=1 // pred_check_branch
      %98 = sbr.rel (0) target = $region49
    $region48: #{tpu_custom_call.1} parent=1 // pred_region
      %99 = dma.done [#allocation6], 384
    $region49: #{tpu_custom_call.1} parent=1 // pred_fallthru
      _
    // Predicated region
    $region50: #{tpu_custom_call.1} parent=1 // pred_check
      _
    $region51: #{tpu_custom_call.1} parent=1 // pred_check_branch
      %101 = sbr.rel (0) target = $region53
    $region52: #{tpu_custom_call.1} parent=1 // pred_region
      %102 = dma.done [#allocation9], 128
    $region53: #{tpu_custom_call.1} parent=1 // pred_fallthru
      _
    // Predicated region
    $region54: #{tpu_custom_call.1} parent=1 // pred_check
      _
    $region55: #{tpu_custom_call.1} parent=1 // pred_check_branch
      %104 = sbr.rel (0) target = $region57
    $region56: #{tpu_custom_call.1} parent=1 // pred_region
      %105 = dma.done [#allocation9], 2048
    $region57: #{tpu_custom_call.1} parent=1 // pred_fallthru
      _
    // Predicated region
    $region58: #{tpu_custom_call.1} parent=1 // pred_check
      _
    $region59: #{tpu_custom_call.1} parent=1 // pred_check_branch
      %107 = sbr.rel (0) target = $region61
    $region60: #{tpu_custom_call.1} parent=1 // pred_region
      %108 = dma.done [#allocation12], 2048
    $region61: #{tpu_custom_call.1} parent=1 // pred_fallthru
      _
    %v109 = vld [vmem:[#allocation2] sm:$0x3]
    %v110 = vld [vmem:[#allocation7] sm:$0xff]
    %v111 = vld [vmem:[#allocation7 + $0x8] sm:$0xff]
    %v112 = vld [vmem:[#allocation7 + $0x10] sm:$0xff]
    %v113 = vld [vmem:[#allocation5] sm:$0x3]
    %v114 = vld [vmem:[#allocation8] sm:$0xff]
    %vm115 = vcmask 64512
    %v117 = vsel %vm115, %v113, 0
    %119 = vmatprep.subr.mxu0 0.0
    %120 = vmatpush1.msra.mxu0 0.0
    %121 = vmatprep.subr.mxu0 0.0
    %122 = vmatpush1.msra.mxu0 0.0
    %123 = vmatprep.subr.mxu0 0.0
    %124 = vmatpush1.msra.mxu0 0.0
    %125 = vmatprep.subr.mxu0 0.0
    %126 = vmatpush1.msra.mxu0 0.0
    %127 = vmatprep.subr.mxu0 0.0
    %128 = vmatpush1.msra.mxu0 0.0
    %129 = vmatprep.subr.mxu0 0.0
    %130 = vmatpush1.msra.mxu0 0.0
    %131 = vmatprep.subr.mxu0 0.0
    %132 = vmatpush1.msra.mxu0 0.0
    %133 = vmatprep.subr.mxu0 0.0
    %134 = vmatpush1.msra.mxu0 0.0
    %135 = vmatprep.subr.mxu0 0.0
    %136 = vmatpush1.msra.mxu0 0.0
    %137 = vmatprep.subr.mxu0 0.0
    %138 = vmatpush1.msra.mxu0 0.0
    %139 = vmatprep.subr.mxu0 0.0
    %140 = vmatpush1.msra.mxu0 0.0
    %141 = vmatprep.subr.mxu0 0.0
    %142 = vmatpush1.msra.mxu0 0.0
    %143 = vmatprep.subr.mxu0 0.0
    %144 = vmatpush1.msra.mxu0 0.0
    %145 = vmatprep.subr.mxu0 0.0
    %146 = vmatpush1.msra.mxu0 0.0
    %147 = vmatprep.subr.mxu0 0.0
    %148 = vmatpush1.msra.mxu0 0.0
    %149 = vmatprep.subr.mxu0 0.0
    %150 = vmatpush1.msra.mxu0 %v114
    %151 = vmatprep.subr.mxu0 0.0
    %152 = vmatpush2.msra.mxu0 0.0
    %153 = vmatprep.subr.mxu0 0.0
    %154 = vmatpush2.msra.mxu0 0.0
    %155 = vmatprep.subr.mxu0 0.0
    %156 = vmatpush2.msra.mxu0 0.0
    %157 = vmatprep.subr.mxu0 0.0
    %158 = vmatpush2.msra.mxu0 0.0
    %159 = vmatprep.subr.mxu0 0.0
    %160 = vmatpush2.msra.mxu0 0.0
    %161 = vmatprep.subr.mxu0 0.0
    %162 = vmatpush2.msra.mxu0 0.0
    %163 = vmatprep.subr.mxu0 0.0
    %164 = vmatpush2.msra.mxu0 0.0
    %165 = vmatprep.subr.mxu0 0.0
    %166 = vmatpush2.msra.mxu0 0.0
    %167 = vmatprep.subr.mxu0 0.0
    %168 = vmatpush2.msra.mxu0 0.0
    %169 = vmatprep.subr.mxu0 0.0
    %170 = vmatpush2.msra.mxu0 0.0
    %171 = vmatprep.subr.mxu0 0.0
    %172 = vmatpush2.msra.mxu0 0.0
    %173 = vmatprep.subr.mxu0 0.0
    %174 = vmatpush2.msra.mxu0 0.0
    %175 = vmatprep.subr.mxu0 0.0
    %176 = vmatpush2.msra.mxu0 0.0
    %177 = vmatprep.subr.mxu0 0.0
    %178 = vmatpush2.msra.mxu0 0.0
    %179 = vmatprep.subr.mxu0 0.0
    %180 = vmatpush2.msra.mxu0 0.0
    %181 = vmatprep.subr.mxu0 0.0
    %182 = vmatpush2.msra.mxu0 0.0
    %183 = vmatprep.mubr.f32.mxu0 0.0
    %184 = vmatmul.mubr.f32.gmra.mxu0 %v117
    %v185 = vpop.f32.mrf.mxu0
    %v186 = vadd.f32 0.0, %v185
    %v187 = vpop.f32.mrf.mxu0
    %188 = vdwg.mxu0
    %vm189 = vcmask 195584
    %v191 = vsel %vm189, %v109, 0
    %193 = vmatprep.subr.mxu0 0.0
    %194 = vmatpush1.msra.mxu0 0.0
    %195 = vmatprep.subr.mxu0 0.0
    %196 = vmatpush1.msra.mxu0 0.0
    %197 = vmatprep.subr.mxu0 0.0
    %198 = vmatpush1.msra.mxu0 0.0
    %199 = vmatprep.subr.mxu0 0.0
    %200 = vmatpush1.msra.mxu0 0.0
    %201 = vmatprep.subr.mxu0 0.0
    %202 = vmatpush1.msra.mxu0 0.0
    %203 = vmatprep.subr.mxu0 0.0
    %204 = vmatpush1.msra.mxu0 0.0
    %205 = vmatprep.subr.mxu0 0.0
    %206 = vmatpush1.msra.mxu0 0.0
    %207 = vmatprep.subr.mxu0 0.0
    %208 = vmatpush1.msra.mxu0 0.0
    %209 = vmatprep.subr.mxu0 0.0
    %210 = vmatpush1.msra.mxu0 0.0
    %211 = vmatprep.subr.mxu0 0.0
    %212 = vmatpush1.msra.mxu0 0.0
    %213 = vmatprep.subr.mxu0 0.0
    %214 = vmatpush1.msra.mxu0 0.0
    %215 = vmatprep.subr.mxu0 0.0
    %216 = vmatpush1.msra.mxu0 0.0
    %217 = vmatprep.subr.mxu0 0.0
    %218 = vmatpush1.msra.mxu0 0.0
    %219 = vmatprep.subr.mxu0 0.0
    %220 = vmatpush1.msra.mxu0 %v112
    %221 = vmatprep.subr.mxu0 0.0
    %222 = vmatpush1.msra.mxu0 %v111
    %223 = vmatprep.subr.mxu0 0.0
    %224 = vmatpush1.msra.mxu0 %v110
    %225 = vmatprep.subr.mxu0 0.0
    %226 = vmatpush2.msra.mxu0 0.0
    %227 = vmatprep.subr.mxu0 0.0
    %228 = vmatpush2.msra.mxu0 0.0
    %229 = vmatprep.subr.mxu0 0.0
    %230 = vmatpush2.msra.mxu0 0.0
    %231 = vmatprep.subr.mxu0 0.0
    %232 = vmatpush2.msra.mxu0 0.0
    %233 = vmatprep.subr.mxu0 0.0
    %234 = vmatpush2.msra.mxu0 0.0
    %235 = vmatprep.subr.mxu0 0.0
    %236 = vmatpush2.msra.mxu0 0.0
    %237 = vmatprep.subr.mxu0 0.0
    %238 = vmatpush2.msra.mxu0 0.0
    %239 = vmatprep.subr.mxu0 0.0
    %240 = vmatpush2.msra.mxu0 0.0
    %241 = vmatprep.subr.mxu0 0.0
    %242 = vmatpush2.msra.mxu0 0.0
    %243 = vmatprep.subr.mxu0 0.0
    %244 = vmatpush2.msra.mxu0 0.0
    %245 = vmatprep.subr.mxu0 0.0
    %246 = vmatpush2.msra.mxu0 0.0
    %247 = vmatprep.subr.mxu0 0.0
    %248 = vmatpush2.msra.mxu0 0.0
    %249 = vmatprep.subr.mxu0 0.0
    %250 = vmatpush2.msra.mxu0 0.0
    %251 = vmatprep.subr.mxu0 0.0
    %252 = vmatpush2.msra.mxu0 0.0
    %253 = vmatprep.subr.mxu0 0.0
    %254 = vmatpush2.msra.mxu0 0.0
    %255 = vmatprep.subr.mxu0 0.0
    %256 = vmatpush2.msra.mxu0 0.0
    %257 = vmatprep.mubr.f32.mxu0 0.0
    %258 = vmatmul.mubr.f32.gmra.mxu0 %v191
    %v259 = vpop.f32.mrf.mxu0
    %v260 = vadd.f32 %v186, %v259
    %v261 = vpop.f32.mrf.mxu0
    %262 = vdwg.mxu0
    %v263 = vld [vmem:[%s4] sm:$0x1]
    %v265 = vlaneseq
    %v266 = vshrl.u32 %v265, 7
    %v267 = vsub.s32 0, %v266
    %v268 = vrot.slane %v263, %v267
    %v270 = vadd.f32 %v260, %v268
    %v271 = vmax.f32 %v270, 0.0
    %v272 = vld [vmem:[#allocation10] sm:$0xff]
    %v273 = vld [vmem:[#allocation10 + $0x8] sm:$0xff]
    %v274 = vld [vmem:[#allocation10 + $0x10] sm:$0xff]
    %v275 = vld [vmem:[#allocation10 + $0x18] sm:$0xff]
    %v276 = vld [vmem:[#allocation10 + $0x20] sm:$0xff]
    %v277 = vld [vmem:[#allocation10 + $0x28] sm:$0xff]
    %v278 = vld [vmem:[#allocation10 + $0x30] sm:$0xff]
    %v279 = vld [vmem:[#allocation10 + $0x38] sm:$0xff]
    %v280 = vld [vmem:[#allocation10 + $0x40] sm:$0xff]
    %v281 = vld [vmem:[#allocation10 + $0x48] sm:$0xff]
    %v282 = vld [vmem:[#allocation10 + $0x50] sm:$0xff]
    %v283 = vld [vmem:[#allocation10 + $0x58] sm:$0xff]
    %v284 = vld [vmem:[#allocation10 + $0x60] sm:$0xff]
    %v285 = vld [vmem:[#allocation10 + $0x68] sm:$0xff]
    %v286 = vld [vmem:[#allocation10 + $0x70] sm:$0xff]
    %v287 = vld [vmem:[#allocation10 + $0x78] sm:$0xff]
    %v288 = vld [vmem:[%s6] sm:$0x1]
    %v290 = vlaneseq
    %v291 = vshrl.u32 %v290, 7
    %v292 = vsub.s32 0, %v291
    %v293 = vrot.slane %v288, %v292
    %295 = vmatprep.subr.mxu0 0.0
    %296 = vmatpush1.msra.mxu0 %v287
    %297 = vmatprep.subr.mxu0 0.0
    %298 = vmatpush1.msra.mxu0 %v286
    %299 = vmatprep.subr.mxu0 0.0
    %300 = vmatpush1.msra.mxu0 %v285
    %301 = vmatprep.subr.mxu0 0.0
    %302 = vmatpush1.msra.mxu0 %v284
    %303 = vmatprep.subr.mxu0 0.0
    %304 = vmatpush1.msra.mxu0 %v283
    %305 = vmatprep.subr.mxu0 0.0
    %306 = vmatpush1.msra.mxu0 %v282
    %307 = vmatprep.subr.mxu0 0.0
    %308 = vmatpush1.msra.mxu0 %v281
    %309 = vmatprep.subr.mxu0 0.0
    %310 = vmatpush1.msra.mxu0 %v280
    %311 = vmatprep.subr.mxu0 0.0
    %312 = vmatpush1.msra.mxu0 %v279
    %313 = vmatprep.subr.mxu0 0.0
    %314 = vmatpush1.msra.mxu0 %v278
    %315 = vmatprep.subr.mxu0 0.0
    %316 = vmatpush1.msra.mxu0 %v277
    %317 = vmatprep.subr.mxu0 0.0
    %318 = vmatpush1.msra.mxu0 %v276
    %319 = vmatprep.subr.mxu0 0.0
    %320 = vmatpush1.msra.mxu0 %v275
    %321 = vmatprep.subr.mxu0 0.0
    %322 = vmatpush1.msra.mxu0 %v274
    %323 = vmatprep.subr.mxu0 0.0
    %324 = vmatpush1.msra.mxu0 %v273
    %325 = vmatprep.subr.mxu0 0.0
    %326 = vmatpush1.msra.mxu0 %v272
    %327 = vmatprep.subr.mxu0 0.0
    %328 = vmatpush2.msra.mxu0 0.0
    %329 = vmatprep.subr.mxu0 0.0
    %330 = vmatpush2.msra.mxu0 0.0
    %331 = vmatprep.subr.mxu0 0.0
    %332 = vmatpush2.msra.mxu0 0.0
    %333 = vmatprep.subr.mxu0 0.0
    %334 = vmatpush2.msra.mxu0 0.0
    %335 = vmatprep.subr.mxu0 0.0
    %336 = vmatpush2.msra.mxu0 0.0
    %337 = vmatprep.subr.mxu0 0.0
    %338 = vmatpush2.msra.mxu0 0.0
    %339 = vmatprep.subr.mxu0 0.0
    %340 = vmatpush2.msra.mxu0 0.0
    %341 = vmatprep.subr.mxu0 0.0
    %342 = vmatpush2.msra.mxu0 0.0
    %343 = vmatprep.subr.mxu0 0.0
    %344 = vmatpush2.msra.mxu0 0.0
    %345 = vmatprep.subr.mxu0 0.0
    %346 = vmatpush2.msra.mxu0 0.0
    %347 = vmatprep.subr.mxu0 0.0
    %348 = vmatpush2.msra.mxu0 0.0
    %349 = vmatprep.subr.mxu0 0.0
    %350 = vmatpush2.msra.mxu0 0.0
    %351 = vmatprep.subr.mxu0 0.0
    %352 = vmatpush2.msra.mxu0 0.0
    %353 = vmatprep.subr.mxu0 0.0
    %354 = vmatpush2.msra.mxu0 0.0
    %355 = vmatprep.subr.mxu0 0.0
    %356 = vmatpush2.msra.mxu0 0.0
    %357 = vmatprep.subr.mxu0 0.0
    %358 = vmatpush2.msra.mxu0 0.0
    %359 = vmatprep.mubr.f32.mxu0 0.0
    %360 = vmatmul.mubr.f32.gmra.mxu0 %v271
    %v361 = vpop.f32.mrf.mxu0
    %v362 = vadd.f32 %v293, %v361
    %v363 = vpop.f32.mrf.mxu0
    %364 = vdwg.mxu0
    %v365 = vmax.f32 %v362, 0.0
    %v366 = vld [vmem:[#allocation11] sm:$0xff]
    %v367 = vld [vmem:[#allocation11 + $0x8] sm:$0xff]
    %v368 = vld [vmem:[#allocation11 + $0x10] sm:$0xff]
    %v369 = vld [vmem:[#allocation11 + $0x18] sm:$0xff]
    %v370 = vld [vmem:[#allocation11 + $0x20] sm:$0xff]
    %v371 = vld [vmem:[#allocation11 + $0x28] sm:$0xff]
    %v372 = vld [vmem:[#allocation11 + $0x30] sm:$0xff]
    %v373 = vld [vmem:[#allocation11 + $0x38] sm:$0xff]
    %v374 = vld [vmem:[#allocation11 + $0x40] sm:$0xff]
    %v375 = vld [vmem:[#allocation11 + $0x48] sm:$0xff]
    %v376 = vld [vmem:[#allocation11 + $0x50] sm:$0xff]
    %v377 = vld [vmem:[#allocation11 + $0x58] sm:$0xff]
    %v378 = vld [vmem:[#allocation11 + $0x60] sm:$0xff]
    %v379 = vld [vmem:[#allocation11 + $0x68] sm:$0xff]
    %v380 = vld [vmem:[#allocation11 + $0x70] sm:$0xff]
    %v381 = vld [vmem:[#allocation11 + $0x78] sm:$0xff]
    %v382 = vld [vmem:[%s8] sm:$0x1]
    %v384 = vlaneseq
    %v385 = vshrl.u32 %v384, 7
    %v386 = vsub.s32 0, %v385
    %v387 = vrot.slane %v382, %v386
    %389 = vmatprep.subr.mxu0 0.0
    %390 = vmatpush1.msra.mxu0 %v381
    %391 = vmatprep.subr.mxu0 0.0
    %392 = vmatpush1.msra.mxu0 %v380
    %393 = vmatprep.subr.mxu0 0.0
    %394 = vmatpush1.msra.mxu0 %v379
    %395 = vmatprep.subr.mxu0 0.0
    %396 = vmatpush1.msra.mxu0 %v378
    %397 = vmatprep.subr.mxu0 0.0
    %398 = vmatpush1.msra.mxu0 %v377
    %399 = vmatprep.subr.mxu0 0.0
    %400 = vmatpush1.msra.mxu0 %v376
    %401 = vmatprep.subr.mxu0 0.0
    %402 = vmatpush1.msra.mxu0 %v375
    %403 = vmatprep.subr.mxu0 0.0
    %404 = vmatpush1.msra.mxu0 %v374
    %405 = vmatprep.subr.mxu0 0.0
    %406 = vmatpush1.msra.mxu0 %v373
    %407 = vmatprep.subr.mxu0 0.0
    %408 = vmatpush1.msra.mxu0 %v372
    %409 = vmatprep.subr.mxu0 0.0
    %410 = vmatpush1.msra.mxu0 %v371
    %411 = vmatprep.subr.mxu0 0.0
    %412 = vmatpush1.msra.mxu0 %v370
    %413 = vmatprep.subr.mxu0 0.0
    %414 = vmatpush1.msra.mxu0 %v369
    %415 = vmatprep.subr.mxu0 0.0
    %416 = vmatpush1.msra.mxu0 %v368
    %417 = vmatprep.subr.mxu0 0.0
    %418 = vmatpush1.msra.mxu0 %v367
    %419 = vmatprep.subr.mxu0 0.0
    %420 = vmatpush1.msra.mxu0 %v366
    %421 = vmatprep.subr.mxu0 0.0
    %422 = vmatpush2.msra.mxu0 0.0
    %423 = vmatprep.subr.mxu0 0.0
    %424 = vmatpush2.msra.mxu0 0.0
    %425 = vmatprep.subr.mxu0 0.0
    %426 = vmatpush2.msra.mxu0 0.0
    %427 = vmatprep.subr.mxu0 0.0
    %428 = vmatpush2.msra.mxu0 0.0
    %429 = vmatprep.subr.mxu0 0.0
    %430 = vmatpush2.msra.mxu0 0.0
    %431 = vmatprep.subr.mxu0 0.0
    %432 = vmatpush2.msra.mxu0 0.0
    %433 = vmatprep.subr.mxu0 0.0
    %434 = vmatpush2.msra.mxu0 0.0
    %435 = vmatprep.subr.mxu0 0.0
    %436 = vmatpush2.msra.mxu0 0.0
    %437 = vmatprep.subr.mxu0 0.0
    %438 = vmatpush2.msra.mxu0 0.0
    %439 = vmatprep.subr.mxu0 0.0
    %440 = vmatpush2.msra.mxu0 0.0
    %441 = vmatprep.subr.mxu0 0.0
    %442 = vmatpush2.msra.mxu0 0.0
    %443 = vmatprep.subr.mxu0 0.0
    %444 = vmatpush2.msra.mxu0 0.0
    %445 = vmatprep.subr.mxu0 0.0
    %446 = vmatpush2.msra.mxu0 0.0
    %447 = vmatprep.subr.mxu0 0.0
    %448 = vmatpush2.msra.mxu0 0.0
    %449 = vmatprep.subr.mxu0 0.0
    %450 = vmatpush2.msra.mxu0 0.0
    %451 = vmatprep.subr.mxu0 0.0
    %452 = vmatpush2.msra.mxu0 0.0
    %453 = vmatprep.mubr.f32.mxu0 0.0
    %454 = vmatmul.mubr.f32.gmra.mxu0 %v365
    %v455 = vpop.f32.mrf.mxu0
    %v456 = vadd.f32 %v387, %v455
    %v457 = vpop.f32.mrf.mxu0
    %458 = vdwg.mxu0
    %459 = vst [vmem:[#allocation13] sm:$0x3] %v456
    // Predicated region
    $region62: #{tpu_custom_call.1} parent=1 // pred_check
      _
    $region63: #{tpu_custom_call.1} parent=1 // pred_check_branch
      %461 = sbr.rel (0) target = $region65
    $region64: #{tpu_custom_call.1} parent=1 // pred_region
      %s463 = ssub.s32 32, 32
      %464 = vsyncadd [#allocation4], %s463
      %s466 = sshll.u32 [#allocation13], 4
      %s467 = int_to_ptr.vmem [resolvable:$true] %s466
      %469 = dma.vmem_to_hbm [thread:$0]  %s467, 32, %s9, [#allocation4]
    $region65: #{tpu_custom_call.1} parent=1 // pred_fallthru
      _
    // Predicated region
    $region66: #{tpu_custom_call.1} parent=1 // pred_check
      _
    $region67: #{tpu_custom_call.1} parent=1 // pred_check_branch
      %471 = sbr.rel (0) target = $region69
    $region68: #{tpu_custom_call.1} parent=1 // pred_region
      %472 = dma.done [#allocation4], 32
    $region69: #{tpu_custom_call.1} parent=1 // pred_fallthru
      _
    %473 = vsyncpa [#allocation3], 1
    %474 = vsyncpa [#allocation6], 1
    %475 = vsyncpa [#allocation9], 1
    %476 = vsyncpa [#allocation12], 1
    %477 = vsyncpa [#allocation4], 1

</llo_original>
